<compile_context>
chip_gen: v7x
topology: tpu7x:2x2x1
jax: 0.10.0
libtpu: 0.0.40
codegen_flags: <defaults>
</compile_context>

<pallas_src>
from functools import lru_cache, partial

import numpy as np
import jax
import jax.numpy as jnp
from jax.experimental import pallas as pl
from jax.experimental.pallas import tpu as pltpu


# ---------------------------------------------------------------------------
# Host-built (cached) interpolation matrices
# ---------------------------------------------------------------------------
def _upsample_matrix(L: int) -> np.ndarray:
    """(2L, L) bilinear interpolation matrix, scale=2, align_corners=False (PyTorch)."""
    U = np.zeros((2 * L, L), dtype=np.float32)
    for o in range(2 * L):
        src = max((o + 0.5) * 0.5 - 0.5, 0.0)
        i0 = min(int(np.floor(src)), L - 1)
        frac = src - i0
        i1 = min(i0 + 1, L - 1)
        U[o, i0] += 1.0 - frac
        U[o, i1] += frac
    return U


@lru_cache(maxsize=None)
def _shift_matrices(H: int, W: int):
    """Row-shifted upsample matrices for the 3 conv taps along each spatial axis.

    S[d, o, :] = U[o + d - 1, :] if the shifted row is in range else 0
    (the zero rows implement the conv's zero 'same' padding).
    """
    def shifted(U):
        L2, L = U.shape
        S = np.zeros((3, L2, L), np.float32)
        for d in range(3):
            for o in range(L2):
                oo = o + d - 1
                if 0 <= oo < L2:
                    S[d, o] = U[oo]
        return S

    return shifted(_upsample_matrix(H)), shifted(_upsample_matrix(W))


def _tpu_kind() -> str:
    try:
        return jax.devices()[0].device_kind.lower()
    except Exception:
        return ""


# ---------------------------------------------------------------------------
# Kernel: fused bilinear x2 upsample + 3x3 'same' conv (+bias) + BN partial stats
#         (Nb batch elements per grid step, lane-dense (row, W2*C) layout)
# ---------------------------------------------------------------------------
def _upconv_stats_kernel(x_ref, uhcat_ref, bcat_ref, bias_ref, y_ref, stat_ref,
                         gs_ref, *, nb, h, wc2):
    # x_ref    : (nb*H,  W*C)     bf16  input, channels interleaved into lanes
    # uhcat_ref: (2H,    3H)      bf16  H-upsample matrices, kh taps concat along K
    # bcat_ref : (W*C,   3*W2*C)  bf16  folded (W-upsample x conv) matrices, kh concat along N
    # bias_ref : (1,     W2*C)    f32   conv bias broadcast over the lane layout
    # y_ref    : (nb*2H, W2*C)    f32   conv output (pre-BN)
    # stat_ref : (1, 2,  W2*C)    f32   row0 = column sums, row1 = column sum-sqs (BN pass 1)
    # gs_ref   : (3H, nb*W2*C)    bf16  scratch: g tiles stacked kh-major in rows, batch in lanes
    h2 = 2 * h

    # One big first matmul covering all in-block batch elements and all 3 kh taps.
    g = jnp.dot(x_ref[...], bcat_ref[...],
                preferred_element_type=jnp.float32)          # (nb*H, 3*W2*C)
    g_bf = g.astype(jnp.bfloat16)                            # single cast pass

    # Aligned block copies: (kh lanes, batch rows) -> (kh rows, batch lanes).
    for kh in range(3):
        for n in range(nb):
            gs_ref[kh * h:(kh + 1) * h, n * wc2:(n + 1) * wc2] = \
                g_bf[n * h:(n + 1) * h, kh * wc2:(kh + 1) * wc2]

    # Single second matmul (K = 3H) finishing the H-upsample + kh-tap reduction
    # for every batch element at once (batch stacked along lanes).
    acc = jnp.dot(uhcat_ref[...], gs_ref[...],
                  preferred_element_type=jnp.float32)        # (2H, nb*W2*C)

    bias = bias_ref[...]                                     # (1, W2*C)
    s = jnp.zeros((1, wc2), jnp.float32)
    ss = jnp.zeros((1, wc2), jnp.float32)
    for n in range(nb):
        yn = acc[:, n * wc2:(n + 1) * wc2] + bias            # (2H, W2*C)
        y_ref[n * h2:(n + 1) * h2, :] = yn
        # BN partial statistics on the live accumulator (sublane reduce only).
        s = s + jnp.sum(yn, axis=0, keepdims=True)
        ss = ss + jnp.sum(yn * yn, axis=0, keepdims=True)
    stat_ref[0] = jnp.concatenate([s, ss], axis=0)           # (2, W2*C)


# ---------------------------------------------------------------------------
# Module wrapper
# ---------------------------------------------------------------------------
@partial(jax.jit, static_argnames=("grid_steps",))
def _forward(x_nchw, params, *, grid_steps):
    w_oihw, bias, gamma, beta = params
    N, C, H, W = x_nchw.shape
    H2, W2 = 2 * H, 2 * W
    WC, WC2 = W * C, W2 * C
    G = grid_steps
    Nb = N // G

    uh_np, uw_np = _shift_matrices(H, W)                     # compile-time constants
    # (2H, 3H): the three shifted H-upsample matrices concatenated along K.
    uhcat = jnp.asarray(np.concatenate([uh_np[k] for k in range(3)], axis=1),
                        jnp.bfloat16)
    uw = jnp.asarray(uw_np, jnp.float32)                     # (3, 2W, W)

    # Fold W-direction interpolation and the conv's (kw, ci)->co contraction,
    # with the 3 kh taps concatenated along the output (lane) axis:
    #   B_cat[w*C+ci, kh*W2*C + q*C+co] = sum_kw Uw_shift[kw, q, w] * weight[co, ci, kh, kw]
    bcat = jnp.einsum('dqw,oikd->wikqo', uw, w_oihw).reshape(WC, 3 * WC2).astype(jnp.bfloat16)
    bias_lane = jnp.tile(bias, W2).reshape(1, WC2).astype(jnp.float32)

    # NCHW -> lane-dense (N*H, W*C); bf16 for the MXU (accumulation stays f32).
    x_flat = jnp.transpose(x_nchw, (0, 2, 3, 1)).reshape(N * H, WC).astype(jnp.bfloat16)

    y_flat, stats = pl.pallas_call(
        partial(_upconv_stats_kernel, nb=Nb, h=H, wc2=WC2),
        out_shape=(
            jax.ShapeDtypeStruct((N * H2, WC2), jnp.float32),
            jax.ShapeDtypeStruct((G, 2, WC2), jnp.float32),
        ),
        grid=(G,),
        in_specs=[
            pl.BlockSpec((Nb * H, WC), lambda i: (i, 0)),
            pl.BlockSpec((H2, 3 * H), lambda i: (0, 0)),
            pl.BlockSpec((WC, 3 * WC2), lambda i: (0, 0)),
            pl.BlockSpec((1, WC2), lambda i: (0, 0)),
        ],
        out_specs=(
            pl.BlockSpec((Nb * H2, WC2), lambda i: (i, 0)),
            pl.BlockSpec((1, 2, WC2), lambda i: (i, 0, 0)),
        ),
        scratch_shapes=[pltpu.VMEM((3 * H, Nb * WC2), jnp.bfloat16)],
        compiler_params=pltpu.CompilerParams(
            dimension_semantics=("parallel",),
        ),
    )(x_flat, uhcat, bcat, bias_lane)

    # BatchNorm (train-mode, batch statistics) as an XLA-fused epilogue:
    # tiny cross-step/lane reduction + per-channel FMA fused with the NCHW relayout.
    cnt = float(N * H2 * W2)
    stat = jnp.sum(stats, axis=0)                            # (2, W2*C)
    s_c = stat[0].reshape(W2, C).sum(axis=0)                 # (C,)
    ss_c = stat[1].reshape(W2, C).sum(axis=0)                # (C,)
    mean = s_c / cnt
    var = ss_c / cnt - mean * mean                           # biased batch variance
    inv = gamma * jax.lax.rsqrt(var + 1e-5)
    shift = beta - mean * inv
    # TODO(synk): running_mean / running_var state updates of nn.BatchNorm2d are not
    # produced (forward activation of a train-mode module only).

    y = y_flat.reshape(N, H2, W2, C)
    out = y * inv + shift                                    # broadcast over C (lanes)
    return jnp.transpose(out, (0, 3, 1, 2))                  # back to NCHW


def upsample_plus_conv_latent(x_nchw, params):
    n = x_nchw.shape[0]
    # v5e/v6e: 1 TensorCore -> collapse the batch grid to a single step.
    # v7x: 2 TensorCores -> keep a 2-way "parallel" grid so both cores get work.
    grid_steps = 2 if ("v7" in _tpu_kind() and n >= 2 and n % 2 == 0) else 1
    return _forward(x_nchw, params, grid_steps=grid_steps)


# ---------------------------------------------------------------------------
# Pure-JAX reference for validation
# ---------------------------------------------------------------------------
def reference(x, w_oihw, bias, gamma, beta):
    N, C, H, W = x.shape
    uh = jnp.asarray(_upsample_matrix(H))
    uw = jnp.asarray(_upsample_matrix(W))
    up = jnp.einsum('ph,nchw->ncpw', uh, x)
    up = jnp.einsum('qw,ncpw->ncpq', uw, up)
    conv = jax.lax.conv_general_dilated(
        up, w_oihw, window_strides=(1, 1), padding='SAME',
        dimension_numbers=('NCHW', 'OIHW', 'NCHW'))
    conv = conv + bias.reshape(1, C, 1, 1)
    mean = jnp.mean(conv, axis=(0, 2, 3), keepdims=True)
    var = jnp.mean((conv - mean) ** 2, axis=(0, 2, 3), keepdims=True)
    y = (conv - mean) * jax.lax.rsqrt(var + 1e-5)
    return y * gamma.reshape(1, C, 1, 1) + beta.reshape(1, C, 1, 1)


if __name__ == "__main__":
    key = jax.random.PRNGKey(0)
    kx, kw, kb = jax.random.split(key, 3)
    N, C, H, W = 2, 4, 16, 16                  # feature = C = 4

    x = jax.random.normal(kx, (N, C, H, W), jnp.float32)
    w = jax.random.normal(kw, (C, C, 3, 3), jnp.float32) * 0.1
    b = jax.random.normal(kb, (C,), jnp.float32) * 0.1
    gamma = jnp.ones((C,), jnp.float32)        # BatchNorm2d default affine init
    beta = jnp.zeros((C,), jnp.float32)

    out = jax.block_until_ready(upsample_plus_conv_latent(x, (w, b, gamma, beta)))
    ref = jax.block_until_ready(reference(x, w, b, gamma, beta))
    np.testing.assert_allclose(np.asarray(out), np.asarray(ref), atol=5e-2, rtol=5e-2)
    print("KERNEL_OK")
</pallas_src>

<mosaic_0001>
module attributes {stable_mosaic.version = 11 : i64} {
  func.func @_upconv_stats_kernel(%arg0: i32, %arg1: memref<32x64xbf16, #tpu.memory_space<vmem>>, %arg2: memref<32x48xbf16, #tpu.memory_space<vmem>>, %arg3: memref<64x384xbf16, #tpu.memory_space<vmem>>, %arg4: memref<1x128xf32, #tpu.memory_space<vmem>>, %arg5: memref<64x128xf32, #tpu.memory_space<vmem>>, %arg6: memref<1x2x128xf32, #tpu.memory_space<vmem>>, %arg7: memref<48x256xbf16, #tpu.memory_space<vmem>>) attributes {dimension_semantics = [#tpu.dimension_semantics<parallel>], iteration_bounds = array<i64: 1>, scalar_prefetch = 0 : i64, scratch_operands = 1 : i64, tpu.core_type = #tpu.core_type<tc>, window_params = [{transform_indices = @transform_0, window_bounds = array<i64: 32, 64>}, {pipeline_mode = #tpu.pipeline_mode<synchronous>, transform_indices = @transform_1, window_bounds = array<i64: 32, 48>}, {pipeline_mode = #tpu.pipeline_mode<synchronous>, transform_indices = @transform_2, window_bounds = array<i64: 64, 384>}, {pipeline_mode = #tpu.pipeline_mode<synchronous>, transform_indices = @transform_3, window_bounds = array<i64: 1, 128>}, {transform_indices = @transform_4, window_bounds = array<i64: 64, 128>}, {transform_indices = @transform_5, window_bounds = array<i64: 1, 2, 128>}]} {
    %c0 = arith.constant 0 : index
    %c0_0 = arith.constant 0 : index
    %0 = vector.load %arg1[%c0, %c0_0] : memref<32x64xbf16, #tpu.memory_space<vmem>>, vector<32x64xbf16>
    %c0_1 = arith.constant 0 : index
    %c0_2 = arith.constant 0 : index
    %1 = vector.load %arg3[%c0_1, %c0_2] : memref<64x384xbf16, #tpu.memory_space<vmem>>, vector<64x384xbf16>
    %cst = arith.constant dense<0.000000e+00> : vector<32x384xf32>
    %2 = tpu.matmul %0, %1, %cst {dimension_numbers = #tpu.dot_dimension_numbers<[1], [0], [0], [1], [0, 0, 1, 1], [], []>} : vector<32x64xbf16>, vector<64x384xbf16>, vector<32x384xf32> -> vector<32x384xf32>
    %3 = arith.truncf %2 : vector<32x384xf32> to vector<32x384xbf16>
    %4 = vector.extract_strided_slice %3 {offsets = [0, 0], sizes = [16, 128], strides = [1, 1]} : vector<32x384xbf16> to vector<16x128xbf16>
    %c0_3 = arith.constant 0 : index
    %c0_4 = arith.constant 0 : index
    %5 = vector.load %arg7[%c0_3, %c0_4] : memref<48x256xbf16, #tpu.memory_space<vmem>>, vector<16x128xbf16>
    tpu.vector_store %arg7[%c0_3, %c0_4], %4 {strides = array<i32>} : memref<48x256xbf16, #tpu.memory_space<vmem>>, vector<16x128xbf16>,
    %6 = vector.extract_strided_slice %3 {offsets = [16, 0], sizes = [16, 128], strides = [1, 1]} : vector<32x384xbf16> to vector<16x128xbf16>
    %c0_5 = arith.constant 0 : index
    %c128 = arith.constant 128 : index
    %7 = vector.load %arg7[%c0_5, %c128] : memref<48x256xbf16, #tpu.memory_space<vmem>>, vector<16x128xbf16>
    tpu.vector_store %arg7[%c0_5, %c128], %6 {strides = array<i32>} : memref<48x256xbf16, #tpu.memory_space<vmem>>, vector<16x128xbf16>,
    %8 = vector.extract_strided_slice %3 {offsets = [0, 128], sizes = [16, 128], strides = [1, 1]} : vector<32x384xbf16> to vector<16x128xbf16>
    %c16 = arith.constant 16 : index
    %c0_6 = arith.constant 0 : index
    %9 = vector.load %arg7[%c16, %c0_6] : memref<48x256xbf16, #tpu.memory_space<vmem>>, vector<16x128xbf16>
    tpu.vector_store %arg7[%c16, %c0_6], %8 {strides = array<i32>} : memref<48x256xbf16, #tpu.memory_space<vmem>>, vector<16x128xbf16>,
    %10 = vector.extract_strided_slice %3 {offsets = [16, 128], sizes = [16, 128], strides = [1, 1]} : vector<32x384xbf16> to vector<16x128xbf16>
    %c16_7 = arith.constant 16 : index
    %c128_8 = arith.constant 128 : index
    %11 = vector.load %arg7[%c16_7, %c128_8] : memref<48x256xbf16, #tpu.memory_space<vmem>>, vector<16x128xbf16>
    tpu.vector_store %arg7[%c16_7, %c128_8], %10 {strides = array<i32>} : memref<48x256xbf16, #tpu.memory_space<vmem>>, vector<16x128xbf16>,
    %12 = vector.extract_strided_slice %3 {offsets = [0, 256], sizes = [16, 128], strides = [1, 1]} : vector<32x384xbf16> to vector<16x128xbf16>
    %c32 = arith.constant 32 : index
    %c0_9 = arith.constant 0 : index
    %13 = vector.load %arg7[%c32, %c0_9] : memref<48x256xbf16, #tpu.memory_space<vmem>>, vector<16x128xbf16>
    tpu.vector_store %arg7[%c32, %c0_9], %12 {strides = array<i32>} : memref<48x256xbf16, #tpu.memory_space<vmem>>, vector<16x128xbf16>,
    %14 = vector.extract_strided_slice %3 {offsets = [16, 256], sizes = [16, 128], strides = [1, 1]} : vector<32x384xbf16> to vector<16x128xbf16>
    %c32_10 = arith.constant 32 : index
    %c128_11 = arith.constant 128 : index
    %15 = vector.load %arg7[%c32_10, %c128_11] : memref<48x256xbf16, #tpu.memory_space<vmem>>, vector<16x128xbf16>
    tpu.vector_store %arg7[%c32_10, %c128_11], %14 {strides = array<i32>} : memref<48x256xbf16, #tpu.memory_space<vmem>>, vector<16x128xbf16>,
    %c0_12 = arith.constant 0 : index
    %c0_13 = arith.constant 0 : index
    %16 = vector.load %arg2[%c0_12, %c0_13] : memref<32x48xbf16, #tpu.memory_space<vmem>>, vector<32x48xbf16>
    %c0_14 = arith.constant 0 : index
    %c0_15 = arith.constant 0 : index
    %17 = vector.load %arg7[%c0_14, %c0_15] : memref<48x256xbf16, #tpu.memory_space<vmem>>, vector<48x256xbf16>
    %cst_16 = arith.constant dense<0.000000e+00> : vector<32x256xf32>
    %18 = tpu.matmul %16, %17, %cst_16 {dimension_numbers = #tpu.dot_dimension_numbers<[1], [0], [0], [1], [0, 0, 1, 1], [], []>} : vector<32x48xbf16>, vector<48x256xbf16>, vector<32x256xf32> -> vector<32x256xf32>
    %c0_17 = arith.constant 0 : index
    %c0_18 = arith.constant 0 : index
    %19 = vector.load %arg4[%c0_17, %c0_18] : memref<1x128xf32, #tpu.memory_space<vmem>>, vector<1x128xf32>
    %cst_19 = arith.constant 0.000000e+00 : f32
    %20 = vector.broadcast %cst_19 : f32 to vector<1x128xf32>
    %cst_20 = arith.constant 0.000000e+00 : f32
    %21 = vector.broadcast %cst_20 : f32 to vector<1x128xf32>
    %22 = vector.extract_strided_slice %18 {offsets = [0, 0], sizes = [32, 128], strides = [1, 1]} : vector<32x256xf32> to vector<32x128xf32>
    %23 = vector.broadcast %19 : vector<1x128xf32> to vector<32x128xf32>
    %24 = arith.addf %22, %23 : vector<32x128xf32>
    %c0_21 = arith.constant 0 : index
    %c0_22 = arith.constant 0 : index
    %25 = vector.load %arg5[%c0_21, %c0_22] : memref<64x128xf32, #tpu.memory_space<vmem>>, vector<32x128xf32>
    tpu.vector_store %arg5[%c0_21, %c0_22], %24 {strides = array<i32>} : memref<64x128xf32, #tpu.memory_space<vmem>>, vector<32x128xf32>,
    %cst_23 = arith.constant dense<0.000000e+00> : vector<128xf32>
    %26 = vector.multi_reduction <add>, %24, %cst_23 [0] : vector<32x128xf32> to vector<128xf32>
    %27 = vector.shape_cast %26 : vector<128xf32> to vector<1x128xf32>
    %28 = arith.addf %20, %27 : vector<1x128xf32>
    %29 = arith.mulf %24, %24 : vector<32x128xf32>
    %cst_24 = arith.constant dense<0.000000e+00> : vector<128xf32>
    %30 = vector.multi_reduction <add>, %29, %cst_24 [0] : vector<32x128xf32> to vector<128xf32>
    %31 = vector.shape_cast %30 : vector<128xf32> to vector<1x128xf32>
    %32 = arith.addf %21, %31 : vector<1x128xf32>
    %33 = vector.extract_strided_slice %18 {offsets = [0, 128], sizes = [32, 128], strides = [1, 1]} : vector<32x256xf32> to vector<32x128xf32>
    %34 = vector.broadcast %19 : vector<1x128xf32> to vector<32x128xf32>
    %35 = arith.addf %33, %34 : vector<32x128xf32>
    %c32_25 = arith.constant 32 : index
    %c0_26 = arith.constant 0 : index
    %36 = vector.load %arg5[%c32_25, %c0_26] : memref<64x128xf32, #tpu.memory_space<vmem>>, vector<32x128xf32>
    tpu.vector_store %arg5[%c32_25, %c0_26], %35 {strides = array<i32>} : memref<64x128xf32, #tpu.memory_space<vmem>>, vector<32x128xf32>,
    %cst_27 = arith.constant dense<0.000000e+00> : vector<128xf32>
    %37 = vector.multi_reduction <add>, %35, %cst_27 [0] : vector<32x128xf32> to vector<128xf32>
    %38 = vector.shape_cast %37 : vector<128xf32> to vector<1x128xf32>
    %39 = arith.addf %28, %38 : vector<1x128xf32>
    %40 = arith.mulf %35, %35 : vector<32x128xf32>
    %cst_28 = arith.constant dense<0.000000e+00> : vector<128xf32>
    %41 = vector.multi_reduction <add>, %40, %cst_28 [0] : vector<32x128xf32> to vector<128xf32>
    %42 = vector.shape_cast %41 : vector<128xf32> to vector<1x128xf32>
    %43 = arith.addf %32, %42 : vector<1x128xf32>
    %44 = tpu.concatenate %39, %43 in 0 : vector<1x128xf32>, vector<1x128xf32> -> vector<2x128xf32>
    %c0_29 = arith.constant 0 : index
    %c0_30 = arith.constant 0 : index
    %c0_31 = arith.constant 0 : index
    %45 = vector.load %arg6[%c0_29, %c0_30, %c0_31] : memref<1x2x128xf32, #tpu.memory_space<vmem>>, vector<1x2x128xf32>
    %46 = vector.shape_cast %45 : vector<1x2x128xf32> to vector<2x128xf32>
    %47 = vector.shape_cast %44 : vector<2x128xf32> to vector<1x2x128xf32>
    tpu.vector_store %arg6[%c0_29, %c0_30, %c0_31], %47 {strides = array<i32>} : memref<1x2x128xf32, #tpu.memory_space<vmem>>, vector<1x2x128xf32>,
    return
  }
  func.func @transform_0(%arg0: i32) -> (i32, i32) {
    %c0_i32 = arith.constant 0 : i32
    %c0_i32_0 = arith.constant 0 : i32
    return %arg0, %c0_i32 : i32, i32
  }
  func.func @transform_1(%arg0: i32) -> (i32, i32) {
    %c0_i32 = arith.constant 0 : i32
    %c0_i32_0 = arith.constant 0 : i32
    %c0_i32_1 = arith.constant 0 : i32
    return %c0_i32, %c0_i32_0 : i32, i32
  }
  func.func @transform_2(%arg0: i32) -> (i32, i32) {
    %c0_i32 = arith.constant 0 : i32
    %c0_i32_0 = arith.constant 0 : i32
    %c0_i32_1 = arith.constant 0 : i32
    return %c0_i32, %c0_i32_0 : i32, i32
  }
  func.func @transform_3(%arg0: i32) -> (i32, i32) {
    %c0_i32 = arith.constant 0 : i32
    %c0_i32_0 = arith.constant 0 : i32
    %c0_i32_1 = arith.constant 0 : i32
    return %c0_i32, %c0_i32_0 : i32, i32
  }
  func.func @transform_4(%arg0: i32) -> (i32, i32) {
    %c0_i32 = arith.constant 0 : i32
    %c0_i32_0 = arith.constant 0 : i32
    return %arg0, %c0_i32 : i32, i32
  }
  func.func @transform_5(%arg0: i32) -> (i32, i32, i32) {
    %c0_i32 = arith.constant 0 : i32
    %c0_i32_0 = arith.constant 0 : i32
    %c0_i32_1 = arith.constant 0 : i32
    return %arg0, %c0_i32, %c0_i32_0 : i32, i32, i32
  }
}

</mosaic_0001>

<llo_original>
// kernel: tile.8
$region0: #{tile.8}
  #allocation0 [shape = 's32[1]{0}', space=sflag, size = 0x4, scoped, tag = 'scoped memory for tile.8']
  %s0 = inlined_call_operand.vmem [shape: f32[4], index: 0, kind: input, shape index: {}]
  %s1 = inlined_call_operand.vmem [shape: f32[32,4], index: 1, kind: output, shape index: {}]
  // Predicated region
  $region2: #{tile.8} parent=0 // pred_check
    _
  $region3: #{tile.8} parent=0 // pred_check_branch
    %3 = sbr.rel (0) target = $region5
  $region4: #{tile.8} parent=0 // pred_region
    _
  $region5: #{tile.8} parent=0 // pred_fallthru
    _
  %v4 = vld [vmem:[%s0] ss:$0 sm:$0xff]
  %5 = vst [vmem:[%s1] sm:$0xff] %v4
  %s6 = scalar_lea.vmem %s1, 8
  %7 = vst [vmem:[%s6] sm:$0xff] %v4
  %s8 = scalar_lea.vmem %s1, 16
  %9 = vst [vmem:[%s8] sm:$0xff] %v4
  %s10 = scalar_lea.vmem %s1, 24
  %11 = vst [vmem:[%s10] sm:$0xff] %v4

// kernel: tile.9
$region0: #{tile.9}
  %s0 = inlined_call_operand.vmem [shape: f32[32,4], index: 0, kind: input, shape index: {}]
  %s1 = inlined_call_operand.vmem [shape: f32[1,128], index: 1, kind: output, shape index: {}]
  $region1: #{tile.9} parent=0
    #allocation0 [shape = 'u8[4096]{0}', space=vmem, size = 0x1000, scoped, tag = 'scoped mem for output reshape']
    %v2 = vld [vmem:[%s0] sm:$0x1]
    %vm3 = vcmask 31744
    %4 = vst.msk [vmem:[#allocation0] sm:$0x1] %vm3, %v2
    %s5 = scalar_lea.vmem %s0, 31
    %v6 = vld [vmem:[%s5] sm:$0x1]
    %7 = vrot.lane.b32.xlu0 %v6, 124
    %v8 = vpop.permute.xlu0 %7
    %vm9 = vcmask 1048544
    %10 = vst.msk [vmem:[#allocation0] sm:$0x1] %vm9, %v8
    %s11 = scalar_lea.vmem %s0, 30
    %v12 = vld [vmem:[%s11] sm:$0x1]
    %13 = vrot.lane.b32.xlu0 %v12, 120
    %v14 = vpop.permute.xlu0 %13
    %vm15 = vcmask 1015744
    %16 = vst.msk [vmem:[#allocation0] sm:$0x1] %vm15, %v14
    %s17 = scalar_lea.vmem %s0, 29
    %v18 = vld [vmem:[%s17] sm:$0x1]
    %19 = vrot.lane.b32.xlu0 %v18, 116
    %v20 = vpop.permute.xlu0 %19
    %vm21 = vcmask 982944
    %22 = vst.msk [vmem:[#allocation0] sm:$0x1] %vm21, %v20
    %s23 = scalar_lea.vmem %s0, 28
    %v24 = vld [vmem:[%s23] sm:$0x1]
    %25 = vrot.lane.b32.xlu0 %v24, 112
    %v26 = vpop.permute.xlu0 %25
    %vm27 = vcmask 950144
    %28 = vst.msk [vmem:[#allocation0] sm:$0x1] %vm27, %v26
    %s29 = scalar_lea.vmem %s0, 27
    %v30 = vld [vmem:[%s29] sm:$0x1]
    %31 = vrot.lane.b32.xlu0 %v30, 108
    %v32 = vpop.permute.xlu0 %31
    %vm33 = vcmask 917344
    %34 = vst.msk [vmem:[#allocation0] sm:$0x1] %vm33, %v32
    %s35 = scalar_lea.vmem %s0, 26
    %v36 = vld [vmem:[%s35] sm:$0x1]
    %37 = vrot.lane.b32.xlu0 %v36, 104
    %v38 = vpop.permute.xlu0 %37
    %vm39 = vcmask 884544
    %40 = vst.msk [vmem:[#allocation0] sm:$0x1] %vm39, %v38
    %s41 = scalar_lea.vmem %s0, 25
    %v42 = vld [vmem:[%s41] sm:$0x1]
    %43 = vrot.lane.b32.xlu0 %v42, 100
    %v44 = vpop.permute.xlu0 %43
    %vm45 = vcmask 851744
    %46 = vst.msk [vmem:[#allocation0] sm:$0x1] %vm45, %v44
    %s47 = scalar_lea.vmem %s0, 24
    %v48 = vld [vmem:[%s47] sm:$0x1]
    %49 = vrot.lane.b32.xlu0 %v48, 96
    %v50 = vpop.permute.xlu0 %49
    %vm51 = vcmask 818944
    %52 = vst.msk [vmem:[#allocation0] sm:$0x1] %vm51, %v50
    %s53 = scalar_lea.vmem %s0, 23
    %v54 = vld [vmem:[%s53] sm:$0x1]
    %55 = vrot.lane.b32.xlu0 %v54, 92
    %v56 = vpop.permute.xlu0 %55
    %vm57 = vcmask 786144
    %58 = vst.msk [vmem:[#allocation0] sm:$0x1] %vm57, %v56
    %s59 = scalar_lea.vmem %s0, 22
    %v60 = vld [vmem:[%s59] sm:$0x1]
    %61 = vrot.lane.b32.xlu0 %v60, 88
    %v62 = vpop.permute.xlu0 %61
    %vm63 = vcmask 753344
    %64 = vst.msk [vmem:[#allocation0] sm:$0x1] %vm63, %v62
    %s65 = scalar_lea.vmem %s0, 21
    %v66 = vld [vmem:[%s65] sm:$0x1]
    %67 = vrot.lane.b32.xlu0 %v66, 84
    %v68 = vpop.permute.xlu0 %67
    %vm69 = vcmask 720544
    %70 = vst.msk [vmem:[#allocation0] sm:$0x1] %vm69, %v68
    %s71 = scalar_lea.vmem %s0, 20
    %v72 = vld [vmem:[%s71] sm:$0x1]
    %73 = vrot.lane.b32.xlu0 %v72, 80
    %v74 = vpop.permute.xlu0 %73
    %vm75 = vcmask 687744
    %76 = vst.msk [vmem:[#allocation0] sm:$0x1] %vm75, %v74
    %s77 = scalar_lea.vmem %s0, 19
    %v78 = vld [vmem:[%s77] sm:$0x1]
    %79 = vrot.lane.b32.xlu0 %v78, 76
    %v80 = vpop.permute.xlu0 %79
    %vm81 = vcmask 654944
    %82 = vst.msk [vmem:[#allocation0] sm:$0x1] %vm81, %v80
    %s83 = scalar_lea.vmem %s0, 18
    %v84 = vld [vmem:[%s83] sm:$0x1]
    %85 = vrot.lane.b32.xlu0 %v84, 72
    %v86 = vpop.permute.xlu0 %85
    %vm87 = vcmask 622144
    %88 = vst.msk [vmem:[#allocation0] sm:$0x1] %vm87, %v86
    %s89 = scalar_lea.vmem %s0, 17
    %v90 = vld [vmem:[%s89] sm:$0x1]
    %91 = vrot.lane.b32.xlu0 %v90, 68
    %v92 = vpop.permute.xlu0 %91
    %vm93 = vcmask 589344
    %94 = vst.msk [vmem:[#allocation0] sm:$0x1] %vm93, %v92
    %s95 = scalar_lea.vmem %s0, 16
    %v96 = vld [vmem:[%s95] sm:$0x1]
    %97 = vrot.lane.b32.xlu0 %v96, 64
    %v98 = vpop.permute.xlu0 %97
    %vm99 = vcmask 556544
    %100 = vst.msk [vmem:[#allocation0] sm:$0x1] %vm99, %v98
    %s101 = scalar_lea.vmem %s0, 15
    %v102 = vld [vmem:[%s101] sm:$0x1]
    %103 = vrot.lane.b32.xlu0 %v102, 60
    %v104 = vpop.permute.xlu0 %103
    %vm105 = vcmask 523744
    %106 = vst.msk [vmem:[#allocation0] sm:$0x1] %vm105, %v104
    %s107 = scalar_lea.vmem %s0, 14
    %v108 = vld [vmem:[%s107] sm:$0x1]
    %109 = vrot.lane.b32.xlu0 %v108, 56
    %v110 = vpop.permute.xlu0 %109
    %vm111 = vcmask 490944
    %112 = vst.msk [vmem:[#allocation0] sm:$0x1] %vm111, %v110
    %s113 = scalar_lea.vmem %s0, 13
    %v114 = vld [vmem:[%s113] sm:$0x1]
    %115 = vrot.lane.b32.xlu0 %v114, 52
    %v116 = vpop.permute.xlu0 %115
    %vm117 = vcmask 458144
    %118 = vst.msk [vmem:[#allocation0] sm:$0x1] %vm117, %v116
    %s119 = scalar_lea.vmem %s0, 12
    %v120 = vld [vmem:[%s119] sm:$0x1]
    %121 = vrot.lane.b32.xlu0 %v120, 48
    %v122 = vpop.permute.xlu0 %121
    %vm123 = vcmask 425344
    %124 = vst.msk [vmem:[#allocation0] sm:$0x1] %vm123, %v122
    %s125 = scalar_lea.vmem %s0, 11
    %v126 = vld [vmem:[%s125] sm:$0x1]
    %127 = vrot.lane.b32.xlu0 %v126, 44
    %v128 = vpop.permute.xlu0 %127
    %vm129 = vcmask 392544
    %130 = vst.msk [vmem:[#allocation0] sm:$0x1] %vm129, %v128
    %s131 = scalar_lea.vmem %s0, 10
    %v132 = vld [vmem:[%s131] sm:$0x1]
    %133 = vrot.lane.b32.xlu0 %v132, 40
    %v134 = vpop.permute.xlu0 %133
    %vm135 = vcmask 359744
    %136 = vst.msk [vmem:[#allocation0] sm:$0x1] %vm135, %v134
    %s137 = scalar_lea.vmem %s0, 9
    %v138 = vld [vmem:[%s137] sm:$0x1]
    %139 = vrot.lane.b32.xlu0 %v138, 36
    %v140 = vpop.permute.xlu0 %139
    %vm141 = vcmask 326944
    %142 = vst.msk [vmem:[#allocation0] sm:$0x1] %vm141, %v140
    %s143 = scalar_lea.vmem %s0, 8
    %v144 = vld [vmem:[%s143] sm:$0x1]
    %145 = vrot.lane.b32.xlu0 %v144, 32
    %v146 = vpop.permute.xlu0 %145
    %vm147 = vcmask 294144
    %148 = vst.msk [vmem:[#allocation0] sm:$0x1] %vm147, %v146
    %s149 = scalar_lea.vmem %s0, 7
    %v150 = vld [vmem:[%s149] sm:$0x1]
    %151 = vrot.lane.b32.xlu0 %v150, 28
    %v152 = vpop.permute.xlu0 %151
    %vm153 = vcmask 261344
    %154 = vst.msk [vmem:[#allocation0] sm:$0x1] %vm153, %v152
    %s155 = scalar_lea.vmem %s0, 6
    %v156 = vld [vmem:[%s155] sm:$0x1]
    %157 = vrot.lane.b32.xlu0 %v156, 24
    %v158 = vpop.permute.xlu0 %157
    %vm159 = vcmask 228544
    %160 = vst.msk [vmem:[#allocation0] sm:$0x1] %vm159, %v158
    %s161 = scalar_lea.vmem %s0, 5
    %v162 = vld [vmem:[%s161] sm:$0x1]
    %163 = vrot.lane.b32.xlu0 %v162, 20
    %v164 = vpop.permute.xlu0 %163
    %vm165 = vcmask 195744
    %166 = vst.msk [vmem:[#allocation0] sm:$0x1] %vm165, %v164
    %s167 = scalar_lea.vmem %s0, 4
    %v168 = vld [vmem:[%s167] sm:$0x1]
    %169 = vrot.lane.b32.xlu0 %v168, 16
    %v170 = vpop.permute.xlu0 %169
    %vm171 = vcmask 162944
    %172 = vst.msk [vmem:[#allocation0] sm:$0x1] %vm171, %v170
    %s173 = scalar_lea.vmem %s0, 3
    %v174 = vld [vmem:[%s173] sm:$0x1]
    %175 = vrot.lane.b32.xlu0 %v174, 12
    %v176 = vpop.permute.xlu0 %175
    %vm177 = vcmask 130144
    %178 = vst.msk [vmem:[#allocation0] sm:$0x1] %vm177, %v176
    %s179 = scalar_lea.vmem %s0, 2
    %v180 = vld [vmem:[%s179] sm:$0x1]
    %181 = vrot.lane.b32.xlu0 %v180, 8
    %v182 = vpop.permute.xlu0 %181
    %vm183 = vcmask 97344
    %184 = vst.msk [vmem:[#allocation0] sm:$0x1] %vm183, %v182
    %s185 = scalar_lea.vmem %s0, 1
    %v186 = vld [vmem:[%s185] sm:$0x1]
    %187 = vrot.lane.b32.xlu0 %v186, 4
    %v188 = vpop.permute.xlu0 %187
    %vm189 = vcmask 64544
    %190 = vst.msk [vmem:[#allocation0] sm:$0x1] %vm189, %v188
    %s192 = sshllo.u32 0, 1
    %v194 = vld [vmem:[#allocation0] sm:%s192]
    %s195 = sshllo.u32 0, 1
    %196 = vst [vmem:[%s1] sm:%s195] %v194

// kernel: squeeze.2
$region0: #{squeeze.2}
  %s0 = inlined_call_operand.vmem [shape: f32[128], index: 0, kind: input, shape index: {}]
  %s1 = inlined_call_operand.vmem [shape: f32[32,4], index: 1, kind: output, shape index: {}]
  $region1: #{squeeze.2} parent=0
    #allocation0 [shape = 'u8[4096]{0}', space=vmem, size = 0x1000, scoped, tag = 'scoped mem for input reshape']
    %s3 = sshllo.u32 0, 1
    %v4 = vld [vmem:[%s0] sm:%s3]
    %5 = vst [vmem:[#allocation0] sm:%s3] %v4
    %v6 = vld [vmem:[#allocation0] sm:$0x1]
    %vm7 = vcmask 31744
    %8 = vst.msk [vmem:[%s1] sm:$0x1] %vm7, %v6
    %v9 = vld [vmem:[#allocation0] sm:$0x1]
    %10 = vrot.lane.b32.xlu0 %v9, 124
    %v11 = vpop.permute.xlu0 %10
    %vm12 = vcmask 31744
    %s13 = scalar_lea.vmem %s1, 1
    %14 = vst.msk [vmem:[%s13] sm:$0x1] %vm12, %v11
    %v15 = vld [vmem:[#allocation0] sm:$0x1]
    %16 = vrot.lane.b32.xlu0 %v15, 120
    %v17 = vpop.permute.xlu0 %16
    %vm18 = vcmask 31744
    %s19 = scalar_lea.vmem %s1, 2
    %20 = vst.msk [vmem:[%s19] sm:$0x1] %vm18, %v17
    %v21 = vld [vmem:[#allocation0] sm:$0x1]
    %22 = vrot.lane.b32.xlu0 %v21, 116
    %v23 = vpop.permute.xlu0 %22
    %vm24 = vcmask 31744
    %s25 = scalar_lea.vmem %s1, 3
    %26 = vst.msk [vmem:[%s25] sm:$0x1] %vm24, %v23
    %v27 = vld [vmem:[#allocation0] sm:$0x1]
    %28 = vrot.lane.b32.xlu0 %v27, 112
    %v29 = vpop.permute.xlu0 %28
    %vm30 = vcmask 31744
    %s31 = scalar_lea.vmem %s1, 4
    %32 = vst.msk [vmem:[%s31] sm:$0x1] %vm30, %v29
    %v33 = vld [vmem:[#allocation0] sm:$0x1]
    %34 = vrot.lane.b32.xlu0 %v33, 108
    %v35 = vpop.permute.xlu0 %34
    %vm36 = vcmask 31744
    %s37 = scalar_lea.vmem %s1, 5
    %38 = vst.msk [vmem:[%s37] sm:$0x1] %vm36, %v35
    %v39 = vld [vmem:[#allocation0] sm:$0x1]
    %40 = vrot.lane.b32.xlu0 %v39, 104
    %v41 = vpop.permute.xlu0 %40
    %vm42 = vcmask 31744
    %s43 = scalar_lea.vmem %s1, 6
    %44 = vst.msk [vmem:[%s43] sm:$0x1] %vm42, %v41
    %v45 = vld [vmem:[#allocation0] sm:$0x1]
    %46 = vrot.lane.b32.xlu0 %v45, 100
    %v47 = vpop.permute.xlu0 %46
    %vm48 = vcmask 31744
    %s49 = scalar_lea.vmem %s1, 7
    %50 = vst.msk [vmem:[%s49] sm:$0x1] %vm48, %v47
    %v51 = vld [vmem:[#allocation0] sm:$0x1]
    %52 = vrot.lane.b32.xlu0 %v51, 96
    %v53 = vpop.permute.xlu0 %52
    %vm54 = vcmask 31744
    %s55 = scalar_lea.vmem %s1, 8
    %56 = vst.msk [vmem:[%s55] sm:$0x1] %vm54, %v53
    %v57 = vld [vmem:[#allocation0] sm:$0x1]
    %58 = vrot.lane.b32.xlu0 %v57, 92
    %v59 = vpop.permute.xlu0 %58
    %vm60 = vcmask 31744
    %s61 = scalar_lea.vmem %s1, 9
    %62 = vst.msk [vmem:[%s61] sm:$0x1] %vm60, %v59
    %v63 = vld [vmem:[#allocation0] sm:$0x1]
    %64 = vrot.lane.b32.xlu0 %v63, 88
    %v65 = vpop.permute.xlu0 %64
    %vm66 = vcmask 31744
    %s67 = scalar_lea.vmem %s1, 10
    %68 = vst.msk [vmem:[%s67] sm:$0x1] %vm66, %v65
    %v69 = vld [vmem:[#allocation0] sm:$0x1]
    %70 = vrot.lane.b32.xlu0 %v69, 84
    %v71 = vpop.permute.xlu0 %70
    %vm72 = vcmask 31744
    %s73 = scalar_lea.vmem %s1, 11
    %74 = vst.msk [vmem:[%s73] sm:$0x1] %vm72, %v71
    %v75 = vld [vmem:[#allocation0] sm:$0x1]
    %76 = vrot.lane.b32.xlu0 %v75, 80
    %v77 = vpop.permute.xlu0 %76
    %vm78 = vcmask 31744
    %s79 = scalar_lea.vmem %s1, 12
    %80 = vst.msk [vmem:[%s79] sm:$0x1] %vm78, %v77
    %v81 = vld [vmem:[#allocation0] sm:$0x1]
    %82 = vrot.lane.b32.xlu0 %v81, 76
    %v83 = vpop.permute.xlu0 %82
    %vm84 = vcmask 31744
    %s85 = scalar_lea.vmem %s1, 13
    %86 = vst.msk [vmem:[%s85] sm:$0x1] %vm84, %v83
    %v87 = vld [vmem:[#allocation0] sm:$0x1]
    %88 = vrot.lane.b32.xlu0 %v87, 72
    %v89 = vpop.permute.xlu0 %88
    %vm90 = vcmask 31744
    %s91 = scalar_lea.vmem %s1, 14
    %92 = vst.msk [vmem:[%s91] sm:$0x1] %vm90, %v89
    %v93 = vld [vmem:[#allocation0] sm:$0x1]
    %94 = vrot.lane.b32.xlu0 %v93, 68
    %v95 = vpop.permute.xlu0 %94
    %vm96 = vcmask 31744
    %s97 = scalar_lea.vmem %s1, 15
    %98 = vst.msk [vmem:[%s97] sm:$0x1] %vm96, %v95
    %v99 = vld [vmem:[#allocation0] sm:$0x1]
    %100 = vrot.lane.b32.xlu0 %v99, 64
    %v101 = vpop.permute.xlu0 %100
    %vm102 = vcmask 31744
    %s103 = scalar_lea.vmem %s1, 16
    %104 = vst.msk [vmem:[%s103] sm:$0x1] %vm102, %v101
    %v105 = vld [vmem:[#allocation0] sm:$0x1]
    %106 = vrot.lane.b32.xlu0 %v105, 60
    %v107 = vpop.permute.xlu0 %106
    %vm108 = vcmask 31744
    %s109 = scalar_lea.vmem %s1, 17
    %110 = vst.msk [vmem:[%s109] sm:$0x1] %vm108, %v107
    %v111 = vld [vmem:[#allocation0] sm:$0x1]
    %112 = vrot.lane.b32.xlu0 %v111, 56
    %v113 = vpop.permute.xlu0 %112
    %vm114 = vcmask 31744
    %s115 = scalar_lea.vmem %s1, 18
    %116 = vst.msk [vmem:[%s115] sm:$0x1] %vm114, %v113
    %v117 = vld [vmem:[#allocation0] sm:$0x1]
    %118 = vrot.lane.b32.xlu0 %v117, 52
    %v119 = vpop.permute.xlu0 %118
    %vm120 = vcmask 31744
    %s121 = scalar_lea.vmem %s1, 19
    %122 = vst.msk [vmem:[%s121] sm:$0x1] %vm120, %v119
    %v123 = vld [vmem:[#allocation0] sm:$0x1]
    %124 = vrot.lane.b32.xlu0 %v123, 48
    %v125 = vpop.permute.xlu0 %124
    %vm126 = vcmask 31744
    %s127 = scalar_lea.vmem %s1, 20
    %128 = vst.msk [vmem:[%s127] sm:$0x1] %vm126, %v125
    %v129 = vld [vmem:[#allocation0] sm:$0x1]
    %130 = vrot.lane.b32.xlu0 %v129, 44
    %v131 = vpop.permute.xlu0 %130
    %vm132 = vcmask 31744
    %s133 = scalar_lea.vmem %s1, 21
    %134 = vst.msk [vmem:[%s133] sm:$0x1] %vm132, %v131
    %v135 = vld [vmem:[#allocation0] sm:$0x1]
    %136 = vrot.lane.b32.xlu0 %v135, 40
    %v137 = vpop.permute.xlu0 %136
    %vm138 = vcmask 31744
    %s139 = scalar_lea.vmem %s1, 22
    %140 = vst.msk [vmem:[%s139] sm:$0x1] %vm138, %v137
    %v141 = vld [vmem:[#allocation0] sm:$0x1]
    %142 = vrot.lane.b32.xlu0 %v141, 36
    %v143 = vpop.permute.xlu0 %142
    %vm144 = vcmask 31744
    %s145 = scalar_lea.vmem %s1, 23
    %146 = vst.msk [vmem:[%s145] sm:$0x1] %vm144, %v143
    %v147 = vld [vmem:[#allocation0] sm:$0x1]
    %148 = vrot.lane.b32.xlu0 %v147, 32
    %v149 = vpop.permute.xlu0 %148
    %vm150 = vcmask 31744
    %s151 = scalar_lea.vmem %s1, 24
    %152 = vst.msk [vmem:[%s151] sm:$0x1] %vm150, %v149
    %v153 = vld [vmem:[#allocation0] sm:$0x1]
    %154 = vrot.lane.b32.xlu0 %v153, 28
    %v155 = vpop.permute.xlu0 %154
    %vm156 = vcmask 31744
    %s157 = scalar_lea.vmem %s1, 25
    %158 = vst.msk [vmem:[%s157] sm:$0x1] %vm156, %v155
    %v159 = vld [vmem:[#allocation0] sm:$0x1]
    %160 = vrot.lane.b32.xlu0 %v159, 24
    %v161 = vpop.permute.xlu0 %160
    %vm162 = vcmask 31744
    %s163 = scalar_lea.vmem %s1, 26
    %164 = vst.msk [vmem:[%s163] sm:$0x1] %vm162, %v161
    %v165 = vld [vmem:[#allocation0] sm:$0x1]
    %166 = vrot.lane.b32.xlu0 %v165, 20
    %v167 = vpop.permute.xlu0 %166
    %vm168 = vcmask 31744
    %s169 = scalar_lea.vmem %s1, 27
    %170 = vst.msk [vmem:[%s169] sm:$0x1] %vm168, %v167
    %v171 = vld [vmem:[#allocation0] sm:$0x1]
    %172 = vrot.lane.b32.xlu0 %v171, 16
    %v173 = vpop.permute.xlu0 %172
    %vm174 = vcmask 31744
    %s175 = scalar_lea.vmem %s1, 28
    %176 = vst.msk [vmem:[%s175] sm:$0x1] %vm174, %v173
    %v177 = vld [vmem:[#allocation0] sm:$0x1]
    %178 = vrot.lane.b32.xlu0 %v177, 12
    %v179 = vpop.permute.xlu0 %178
    %vm180 = vcmask 31744
    %s181 = scalar_lea.vmem %s1, 29
    %182 = vst.msk [vmem:[%s181] sm:$0x1] %vm180, %v179
    %v183 = vld [vmem:[#allocation0] sm:$0x1]
    %184 = vrot.lane.b32.xlu0 %v183, 8
    %v185 = vpop.permute.xlu0 %184
    %vm186 = vcmask 31744
    %s187 = scalar_lea.vmem %s1, 30
    %188 = vst.msk [vmem:[%s187] sm:$0x1] %vm186, %v185
    %v189 = vld [vmem:[#allocation0] sm:$0x1]
    %190 = vrot.lane.b32.xlu0 %v189, 4
    %v191 = vpop.permute.xlu0 %190
    %vm192 = vcmask 31744
    %s193 = scalar_lea.vmem %s1, 31
    %194 = vst.msk [vmem:[%s193] sm:$0x1] %vm192, %v191

// kernel: _forward.1
$region0: #{_forward.1}
  #allocation0 [shape = 'u32[]', space=smem, size = 0x4, offset = 0x4, fixed_abs, tag = 'smem constant byte address 0x4 - core index']
  #allocation1 [shape = 'u32[144,128]{1,0:T(1,128)}', space=vmem, size = 0x12000, scoped, tag = 'internal scratch']
  #allocation2 [shape = 'bf16[48,256]{1,0:T(16,128)(2,1)}', space=vmem, size = 0x6000, scoped, tag = 'scratch operand']
  %s0 = inlined_call_operand.vmem [shape: bf16[32,64], index: 0, kind: input, shape index: {}]
  %s1 = inlined_call_operand.vmem [shape: bf16[32,48], index: 1, kind: input, shape index: {}]
  %s2 = inlined_call_operand.vmem [shape: bf16[64,384], index: 2, kind: input, shape index: {}]
  %s3 = inlined_call_operand.vmem [shape: f32[1,128], index: 3, kind: input, shape index: {}]
  %s4 = inlined_call_operand.vmem [shape: f32[64,128], index: 4, kind: output, shape index: {0}]
  %s5 = inlined_call_operand.vmem [shape: f32[1,2,128], index: 5, kind: output, shape index: {1}]
  %6 = xla_tuple %s4, %s5
  %s7 = sld [smem:[#allocation0]]
  $region34: #{_forward.1} parent=0
    _
  %s9 = ssub.s32 1, %s7
  %s10 = scalar_select 0, %s9, %s7
  // Predicated region
  $region2: #{_forward.1} parent=0 // pred_check
    _
  $region3: #{_forward.1} parent=0 // pred_check_branch
    %12 = sbr.rel (0) target = $region5
  $region4: #{_forward.1} parent=0 // pred_region
    _
  $region5: #{_forward.1} parent=0 // pred_fallthru
    _
  // Predicated region
  $region6: #{_forward.1} parent=0 // pred_check
    _
  $region7: #{_forward.1} parent=0 // pred_check_branch
    %14 = sbr.rel (0) target = $region9
  $region8: #{_forward.1} parent=0 // pred_region
    _
  $region9: #{_forward.1} parent=0 // pred_fallthru
    _
  // Predicated region
  $region10: #{_forward.1} parent=0 // pred_check
    _
  $region11: #{_forward.1} parent=0 // pred_check_branch
    %16 = sbr.rel (0) target = $region13
  $region12: #{_forward.1} parent=0 // pred_region
    _
  $region13: #{_forward.1} parent=0 // pred_fallthru
    _
  // Predicated region
  $region14: #{_forward.1} parent=0 // pred_check
    _
  $region15: #{_forward.1} parent=0 // pred_check_branch
    %18 = sbr.rel (0) target = $region17
  $region16: #{_forward.1} parent=0 // pred_region
    _
  $region17: #{_forward.1} parent=0 // pred_fallthru
    _
  %v20 = vld [vmem:[%s0] sm:$0xf]
  %v21 = vld [vmem:[%s0 + $0x4] sm:$0xf]
  %v22 = vld [vmem:[%s0 + $0x8] sm:$0xf]
  %v23 = vld [vmem:[%s0 + $0xc] sm:$0xf]
  %v24 = vld [vmem:[%s2] sm:$0xff]
  %v25 = vld [vmem:[%s2 + $0x8] sm:$0xf]
  %v26 = vld [vmem:[%s2 + $0xc] sm:$0xff]
  %v27 = vld [vmem:[%s2 + $0x14] sm:$0xf]
  %v28 = vld [vmem:[%s2 + $0x18] sm:$0xff]
  %v29 = vld [vmem:[%s2 + $0x20] sm:$0xf]
  %v30 = vld [vmem:[%s2 + $0x24] sm:$0xff]
  %v31 = vld [vmem:[%s2 + $0x2c] sm:$0xf]
  %v32 = vld [vmem:[%s2 + $0x30] sm:$0xff]
  %v33 = vld [vmem:[%s2 + $0x38] sm:$0xf]
  %v34 = vld [vmem:[%s2 + $0x3c] sm:$0xff]
  %v35 = vld [vmem:[%s2 + $0x44] sm:$0xf]
  %v36 = vld [vmem:[%s2 + $0x48] sm:$0xff]
  %v37 = vld [vmem:[%s2 + $0x50] sm:$0xf]
  %v38 = vld [vmem:[%s2 + $0x54] sm:$0xff]
  %v39 = vld [vmem:[%s2 + $0x5c] sm:$0xf]
  %v44 = vunpack.c.l.b16 %v20
  %v45 = vunpack.c.l.b16 %v21
  %v46 = vunpack.c.l.b16 %v22
  %v47 = vunpack.c.l.b16 %v23
  %v48 = vpack.c.b16 %v45, %v44
  %v49 = vpack.c.b16 %v47, %v46
  %v66 = vunpack.c.l.b16 %v24
  %v67 = vunpack.c.h.b16 %v24
  %v68 = vunpack.c.l.b16 %v25
  %v69 = vunpack.c.l.b16 %v26
  %v70 = vunpack.c.h.b16 %v26
  %v71 = vunpack.c.l.b16 %v27
  %v72 = vunpack.c.l.b16 %v28
  %v73 = vunpack.c.h.b16 %v28
  %v74 = vunpack.c.l.b16 %v29
  %v75 = vunpack.c.l.b16 %v30
  %v76 = vunpack.c.h.b16 %v30
  %v77 = vunpack.c.l.b16 %v31
  %v78 = vunpack.c.l.b16 %v32
  %v79 = vunpack.c.h.b16 %v32
  %v80 = vunpack.c.l.b16 %v33
  %v81 = vunpack.c.l.b16 %v34
  %v82 = vunpack.c.h.b16 %v34
  %v83 = vunpack.c.l.b16 %v35
  %v84 = vunpack.c.l.b16 %v36
  %v85 = vunpack.c.h.b16 %v36
  %v86 = vunpack.c.l.b16 %v37
  %v87 = vunpack.c.l.b16 %v38
  %v88 = vunpack.c.h.b16 %v38
  %v89 = vunpack.c.l.b16 %v39
  %v90 = vpack.c.b16 %v69, %v66
  %v91 = vpack.c.b16 %v70, %v67
  %v92 = vpack.c.b16 %v71, %v68
  %v93 = vpack.c.b16 %v75, %v72
  %v94 = vpack.c.b16 %v76, %v73
  %v95 = vpack.c.b16 %v77, %v74
  %v96 = vpack.c.b16 %v81, %v78
  %v97 = vpack.c.b16 %v82, %v79
  %v98 = vpack.c.b16 %v83, %v80
  %v99 = vpack.c.b16 %v87, %v84
  %v100 = vpack.c.b16 %v88, %v85
  %v101 = vpack.c.b16 %v89, %v86
  %vm114 = vcmask 523264
  %v116 = vsel %vm114, %v48, 0
  %v119 = vsel %vm114, %v49, 0
  %121 = vmatprep.subr.bf16.mxu0 %v91
  %122 = vmatpush1.bf16.msra.mxu0 %v90
  %123 = vmatprep.subr.bf16.mxu0 %v94
  %124 = vmatpush1.bf16.msra.mxu0 %v93
  %125 = vmatprep.subr.bf16.mxu0 %v97
  %126 = vmatpush1.bf16.msra.mxu0 %v96
  %127 = vmatprep.subr.bf16.mxu0 %v100
  %128 = vmatpush1.bf16.msra.mxu0 %v99
  %129 = vmatprep.subr.bf16.mxu0 0
  %130 = vmatpush1.bf16.msra.mxu0 0
  %131 = vmatprep.subr.bf16.mxu0 0
  %132 = vmatpush1.bf16.msra.mxu0 0
  %133 = vmatprep.subr.bf16.mxu0 0
  %134 = vmatpush1.bf16.msra.mxu0 0
  %135 = vmatprep.subr.bf16.mxu0 0
  %136 = vmatpush1.bf16.msra.mxu0 0
  %137 = vmatprep.subr.bf16.mxu0 0
  %138 = vmatpush1.bf16.msra.mxu0 0
  %139 = vmatprep.subr.bf16.mxu0 0
  %140 = vmatpush1.bf16.msra.mxu0 0
  %141 = vmatprep.subr.bf16.mxu0 0
  %142 = vmatpush1.bf16.msra.mxu0 0
  %143 = vmatprep.subr.bf16.mxu0 0
  %144 = vmatpush1.bf16.msra.mxu0 0
  %145 = vmatprep.subr.bf16.mxu0 0
  %146 = vmatpush1.bf16.msra.mxu0 0
  %147 = vmatprep.subr.bf16.mxu0 0
  %148 = vmatpush1.bf16.msra.mxu0 0
  %149 = vmatprep.subr.bf16.mxu0 0
  %150 = vmatpush1.bf16.msra.mxu0 0
  %151 = vmatprep.subr.bf16.mxu0 0
  %152 = vmatpush1.bf16.msra.mxu0 0
  %153 = vmatprep.mubr.bf16.mxu0 0
  %154 = vmatmul.mubr.bf16.gmra.mrb[0].mxu0 %v116
  %v155 = vpop.f32.mrb[0].mxu0
  %v156 = vadd.f32 0.0, %v155
  %v157 = vpop.f32.mrb[0].mxu0
  %v158 = vadd.f32 0.0, %v157
  %v159 = vpop.f32.mrb[0].mxu0
  %v160 = vadd.f32 0.0, %v159
  %v161 = vpop.f32.mrb[0].mxu0
  %v162 = vadd.f32 0.0, %v161
  %163 = vmatprep.mubr.bf16.mxu0 0
  %164 = vmatmul.mubr.bf16.gmra.mrb[0].mxu0 %v119
  %v165 = vpop.f32.mrb[0].mxu0
  %v166 = vadd.f32 0.0, %v165
  %v167 = vpop.f32.mrb[0].mxu0
  %v168 = vadd.f32 0.0, %v167
  %v169 = vpop.f32.mrb[0].mxu0
  %v170 = vadd.f32 0.0, %v169
  %v171 = vpop.f32.mrb[0].mxu0
  %v172 = vadd.f32 0.0, %v171
  %173 = vdwg.mxu0
  %174 = vmatprep.subr.bf16.mxu0 0
  %175 = vmatpush1.bf16.msra.mxu0 %v92
  %176 = vmatprep.subr.bf16.mxu0 0
  %177 = vmatpush1.bf16.msra.mxu0 %v95
  %178 = vmatprep.subr.bf16.mxu0 0
  %179 = vmatpush1.bf16.msra.mxu0 %v98
  %180 = vmatprep.subr.bf16.mxu0 0
  %181 = vmatpush1.bf16.msra.mxu0 %v101
  %182 = vmatprep.subr.bf16.mxu0 0
  %183 = vmatpush1.bf16.msra.mxu0 0
  %184 = vmatprep.subr.bf16.mxu0 0
  %185 = vmatpush1.bf16.msra.mxu0 0
  %186 = vmatprep.subr.bf16.mxu0 0
  %187 = vmatpush1.bf16.msra.mxu0 0
  %188 = vmatprep.subr.bf16.mxu0 0
  %189 = vmatpush1.bf16.msra.mxu0 0
  %190 = vmatprep.subr.bf16.mxu0 0
  %191 = vmatpush1.bf16.msra.mxu0 0
  %192 = vmatprep.subr.bf16.mxu0 0
  %193 = vmatpush1.bf16.msra.mxu0 0
  %194 = vmatprep.subr.bf16.mxu0 0
  %195 = vmatpush1.bf16.msra.mxu0 0
  %196 = vmatprep.subr.bf16.mxu0 0
  %197 = vmatpush1.bf16.msra.mxu0 0
  %198 = vmatprep.subr.bf16.mxu0 0
  %199 = vmatpush1.bf16.msra.mxu0 0
  %200 = vmatprep.subr.bf16.mxu0 0
  %201 = vmatpush1.bf16.msra.mxu0 0
  %202 = vmatprep.subr.bf16.mxu0 0
  %203 = vmatpush1.bf16.msra.mxu0 0
  %204 = vmatprep.subr.bf16.mxu0 0
  %205 = vmatpush1.bf16.msra.mxu0 0
  %206 = vmatprep.mubr.bf16.mxu0 0
  %207 = vmatmul.mubr.bf16.gmra.mrb[0].mxu0 %v116
  %v208 = vpop.f32.mrb[0].mxu0
  %v209 = vadd.f32 0.0, %v208
  %v210 = vpop.f32.mrb[0].mxu0
  %v211 = vpop.f32.mrb[0].mxu0
  %v212 = vadd.f32 0.0, %v211
  %v213 = vpop.f32.mrb[0].mxu0
  %214 = vmatprep.mubr.bf16.mxu0 0
  %215 = vmatmul.mubr.bf16.gmra.mrb[0].mxu0 %v119
  %v216 = vpop.f32.mrb[0].mxu0
  %v217 = vadd.f32 0.0, %v216
  %v218 = vpop.f32.mrb[0].mxu0
  %v219 = vpop.f32.mrb[0].mxu0
  %v220 = vadd.f32 0.0, %v219
  %v221 = vpop.f32.mrb[0].mxu0
  %222 = vdwg.mxu0
  %v223 = vpack.c.bf16 %v160, %v156
  %v224 = vpack.c.bf16 %v162, %v158
  %v225 = vpack.c.bf16 %v212, %v209
  %v226 = vpack.c.bf16 %v170, %v166
  %v227 = vpack.c.bf16 %v172, %v168
  %v228 = vpack.c.bf16 %v220, %v217
  %229 = vst [vmem:[#allocation2] sm:$0xff] %v223
  %230 = vst [vmem:[#allocation2 + $0x8] sm:$0xff] %v226
  %231 = vst [vmem:[#allocation2 + $0x10] sm:$0xff] %v224
  %232 = vst [vmem:[#allocation2 + $0x18] sm:$0xff] %v227
  %233 = vst [vmem:[#allocation2 + $0x20] sm:$0xff] %v225
  %234 = vst [vmem:[#allocation2 + $0x28] sm:$0xff] %v228
  %v235 = vld [vmem:[%s1] sm:$0xf]
  %v236 = vld [vmem:[%s1 + $0x4] sm:$0xf]
  %v237 = vld [vmem:[%s1 + $0x8] sm:$0xf]
  %v238 = vld [vmem:[%s1 + $0xc] sm:$0xf]
  %v239 = vld [vmem:[#allocation2] sm:$0xff]
  %v240 = vld [vmem:[#allocation2 + $0x8] sm:$0xff]
  %v241 = vld [vmem:[#allocation2 + $0x10] sm:$0xff]
  %v242 = vld [vmem:[#allocation2 + $0x18] sm:$0xff]
  %v243 = vld [vmem:[#allocation2 + $0x20] sm:$0xff]
  %v244 = vld [vmem:[#allocation2 + $0x28] sm:$0xff]
  %v249 = vunpack.c.l.b16 %v235
  %v250 = vunpack.c.l.b16 %v236
  %v251 = vunpack.c.l.b16 %v237
  %v252 = vunpack.c.l.b16 %v238
  %v253 = vpack.c.b16 %v250, %v249
  %v254 = vpack.c.b16 %v252, %v251
  %vm255 = vcmask 392192
  %v257 = vsel %vm255, %v253, 0
  %v260 = vsel %vm255, %v254, 0
  %262 = vmatprep.subr.bf16.mxu0 %v240
  %263 = vmatpush1.bf16.msra.mxu0 %v239
  %264 = vmatprep.subr.bf16.mxu0 %v242
  %265 = vmatpush1.bf16.msra.mxu0 %v241
  %266 = vmatprep.subr.bf16.mxu0 %v244
  %267 = vmatpush1.bf16.msra.mxu0 %v243
  %268 = vmatprep.subr.bf16.mxu0 0
  %269 = vmatpush1.bf16.msra.mxu0 0
  %270 = vmatprep.subr.bf16.mxu0 0
  %271 = vmatpush1.bf16.msra.mxu0 0
  %272 = vmatprep.subr.bf16.mxu0 0
  %273 = vmatpush1.bf16.msra.mxu0 0
  %274 = vmatprep.subr.bf16.mxu0 0
  %275 = vmatpush1.bf16.msra.mxu0 0
  %276 = vmatprep.subr.bf16.mxu0 0
  %277 = vmatpush1.bf16.msra.mxu0 0
  %278 = vmatprep.subr.bf16.mxu0 0
  %279 = vmatpush1.bf16.msra.mxu0 0
  %280 = vmatprep.subr.bf16.mxu0 0
  %281 = vmatpush1.bf16.msra.mxu0 0
  %282 = vmatprep.subr.bf16.mxu0 0
  %283 = vmatpush1.bf16.msra.mxu0 0
  %284 = vmatprep.subr.bf16.mxu0 0
  %285 = vmatpush1.bf16.msra.mxu0 0
  %286 = vmatprep.subr.bf16.mxu0 0
  %287 = vmatpush1.bf16.msra.mxu0 0
  %288 = vmatprep.subr.bf16.mxu0 0
  %289 = vmatpush1.bf16.msra.mxu0 0
  %290 = vmatprep.subr.bf16.mxu0 0
  %291 = vmatpush1.bf16.msra.mxu0 0
  %292 = vmatprep.subr.bf16.mxu0 0
  %293 = vmatpush1.bf16.msra.mxu0 0
  %294 = vmatprep.mubr.bf16.mxu0 0
  %295 = vmatmul.mubr.bf16.gmra.mrb[0].mxu0 %v257
  %v296 = vpop.f32.mrb[0].mxu0
  %v297 = vadd.f32 0.0, %v296
  %v298 = vpop.f32.mrb[0].mxu0
  %v299 = vadd.f32 0.0, %v298
  %v300 = vpop.f32.mrb[0].mxu0
  %v301 = vadd.f32 0.0, %v300
  %v302 = vpop.f32.mrb[0].mxu0
  %v303 = vadd.f32 0.0, %v302
  %304 = vmatprep.mubr.bf16.mxu0 0
  %305 = vmatmul.mubr.bf16.gmra.mrb[0].mxu0 %v260
  %v306 = vpop.f32.mrb[0].mxu0
  %v307 = vadd.f32 0.0, %v306
  %v308 = vpop.f32.mrb[0].mxu0
  %v309 = vadd.f32 0.0, %v308
  %v310 = vpop.f32.mrb[0].mxu0
  %v311 = vadd.f32 0.0, %v310
  %v312 = vpop.f32.mrb[0].mxu0
  %v313 = vadd.f32 0.0, %v312
  %314 = vdwg.mxu0
  %v315 = vld [vmem:[%s3] sm:$0x1]
  %v317 = vlaneseq
  %v318 = vshrl.u32 %v317, 7
  %v319 = vsub.s32 0, %v318
  %v320 = vrot.slane %v315, %v319
  %v322 = vadd.f32 %v297, %v320
  %v323 = vadd.f32 %v301, %v320
  %v324 = vadd.f32 %v307, %v320
  %v325 = vadd.f32 %v311, %v320
  %326 = vst [vmem:[%s4] sm:$0xff] %v322
  %327 = vst [vmem:[%s4 + $0x8] sm:$0xff] %v323
  %328 = vst [vmem:[%s4 + $0x10] sm:$0xff] %v324
  %329 = vst [vmem:[%s4 + $0x18] sm:$0xff] %v325
  %v330 = vadd.f32 %v322, %v323
  %v331 = vadd.f32 %v330, %v324
  %v332 = vadd.f32 %v331, %v325
  %v333 = vrot.slane %v332, 4
  %v334 = vadd.f32 %v332, %v333
  %v335 = vrot.slane %v334, 2
  %v336 = vadd.f32 %v334, %v335
  %v337 = vrot.slane %v336, 1
  %v338 = vadd.f32 %v336, %v337
  %v339 = vadd.f32 %v338, 0.0
  %v340 = vmul.f32 %v322, %v322
  %v341 = vmul.f32 %v323, %v323
  %v342 = vmul.f32 %v324, %v324
  %v343 = vmul.f32 %v325, %v325
  %v344 = vadd.f32 %v340, %v341
  %v345 = vadd.f32 %v344, %v342
  %v346 = vadd.f32 %v345, %v343
  %v347 = vrot.slane %v346, 4
  %v348 = vadd.f32 %v346, %v347
  %v349 = vrot.slane %v348, 2
  %v350 = vadd.f32 %v348, %v349
  %v351 = vrot.slane %v350, 1
  %v352 = vadd.f32 %v350, %v351
  %v353 = vadd.f32 %v352, 0.0
  %v354 = vadd.f32 %v299, %v320
  %v355 = vadd.f32 %v303, %v320
  %v356 = vadd.f32 %v309, %v320
  %v357 = vadd.f32 %v313, %v320
  %358 = vst [vmem:[%s4 + $0x20] sm:$0xff] %v354
  %359 = vst [vmem:[%s4 + $0x28] sm:$0xff] %v355
  %360 = vst [vmem:[%s4 + $0x30] sm:$0xff] %v356
  %361 = vst [vmem:[%s4 + $0x38] sm:$0xff] %v357
  %v362 = vadd.f32 %v354, %v355
  %v363 = vadd.f32 %v362, %v356
  %v364 = vadd.f32 %v363, %v357
  %v365 = vrot.slane %v364, 4
  %v366 = vadd.f32 %v364, %v365
  %v367 = vrot.slane %v366, 2
  %v368 = vadd.f32 %v366, %v367
  %v369 = vrot.slane %v368, 1
  %v370 = vadd.f32 %v368, %v369
  %v371 = vadd.f32 %v339, %v370
  %v372 = vmul.f32 %v354, %v354
  %v373 = vmul.f32 %v355, %v355
  %v374 = vmul.f32 %v356, %v356
  %v375 = vmul.f32 %v357, %v357
  %v376 = vadd.f32 %v372, %v373
  %v377 = vadd.f32 %v376, %v374
  %v378 = vadd.f32 %v377, %v375
  %v379 = vrot.slane %v378, 4
  %v380 = vadd.f32 %v378, %v379
  %v381 = vrot.slane %v380, 2
  %v382 = vadd.f32 %v380, %v381
  %v383 = vrot.slane %v382, 1
  %v384 = vadd.f32 %v382, %v383
  %v385 = vadd.f32 %v353, %v384
  %vm386 = vcmask 1040384
  %v387 = vsel %vm386, %v371, %v385
  %388 = vst [vmem:[%s5] sm:$0x3] %v387
  // Predicated region
  $region18: #{_forward.1} parent=0 // pred_check
    _
  $region19: #{_forward.1} parent=0 // pred_check_branch
    %390 = sbr.rel (0) target = $region21
  $region20: #{_forward.1} parent=0 // pred_region
    _
  $region21: #{_forward.1} parent=0 // pred_fallthru
    _
  // Predicated region
  $region22: #{_forward.1} parent=0 // pred_check
    _
  $region23: #{_forward.1} parent=0 // pred_check_branch
    %392 = sbr.rel (0) target = $region25
  $region24: #{_forward.1} parent=0 // pred_region
    _
  $region25: #{_forward.1} parent=0 // pred_fallthru
    _
  // Predicated region
  $region26: #{_forward.1} parent=0 // pred_check
    _
  $region27: #{_forward.1} parent=0 // pred_check_branch
    %394 = sbr.rel (0) target = $region29
  $region28: #{_forward.1} parent=0 // pred_region
    _
  $region29: #{_forward.1} parent=0 // pred_fallthru
    _
  // Predicated region
  $region30: #{_forward.1} parent=0 // pred_check
    _
  $region31: #{_forward.1} parent=0 // pred_check_branch
    %396 = sbr.rel (0) target = $region33
  $region32: #{_forward.1} parent=0 // pred_region
    _
  $region33: #{_forward.1} parent=0 // pred_fallthru
    _

</llo_original>
